<compile_context>
chip_gen: v5e
topology: v5e:2x2
jax: 0.10.0
libtpu: 0.0.40
codegen_flags: <defaults>
</compile_context>

<pallas_src>
import functools

import jax
import jax.numpy as jnp
from jax.experimental import pallas as pl
from jax.experimental.pallas import tpu as pltpu


def _round_up(x, m):
    return -(-x // m) * m


def _wbce_kernel(out_ref, tgt_ref, sum_ref, acc_ref, *, epsilon, w0, w1, n_valid):
    s = pl.program_id(0)          # parallel slice (megacore axis)
    i = pl.program_id(1)          # reduction step within the slice
    br, cols = out_ref.shape
    block_elems = br * cols

    @pl.when(i == 0)
    def _():
        acc_ref[...] = jnp.zeros_like(acc_ref)

    o = jnp.clip(out_ref[...].astype(jnp.float32), epsilon, 1.0 - epsilon)
    t = tgt_ref[...].astype(jnp.float32)
    # Weights are compile-time constants (folded by the compiler).
    loss = w0 * (t * jnp.log(o)) + w1 * ((1.0 - t) * jnp.log(1.0 - o))

    # Linear offset of this tile in the flattened tensor.
    # NOTE: int32 math — fine for tensors up to ~2^31 elements.
    block_idx = s * pl.num_programs(1) + i
    base = block_idx * block_elems
    no_tail = base + block_elems <= n_valid   # tile contains no padded elements

    @pl.when(no_tail)
    def _():
        # Fast path: plain fold into the (8, cols) accumulator.
        acc_ref[...] += jnp.sum(loss.reshape(br // 8, 8, cols), axis=0)

    @pl.when(jnp.logical_not(no_tail))
    def _():
        # Slow path (only for tiles touching the padded tail): zero out padding.
        row = jax.lax.broadcasted_iota(jnp.int32, (br, cols), 0)
        col = jax.lax.broadcasted_iota(jnp.int32, (br, cols), 1)
        lin = base + row * cols + col
        masked = jnp.where(lin < n_valid, loss, 0.0)
        acc_ref[...] += jnp.sum(masked.reshape(br // 8, 8, cols), axis=0)

    @pl.when(i == pl.num_programs(1) - 1)
    def _():
        total = jnp.sum(acc_ref[...])
        sum_ref[...] = jnp.zeros(sum_ref.shape, jnp.float32) + total


def weighted_bce_loss(out, target, weights=None, epsilon=0.01,
                      block_rows=1024, cols=512):
    """Pallas implementation of WeightedBCELoss.forward.

    `weights` must be None or a static length-2 sequence of Python numbers
    (matching the PyTorch module's usage); they are baked into the kernel.
    """
    n = out.size
    assert target.size == n

    if weights is None:
        # Matches the PyTorch reference: 2*t*log(o) + 1*(1-t)*log(1-o).
        w0, w1 = 2.0, 1.0
    else:
        assert len(weights) == 2
        w0, w1 = float(weights[0]), float(weights[1])

    # ---- slab / tiling geometry (all static Python ints) -------------------
    rows = -(-n // cols)
    block_rows_eff = min(block_rows, _round_up(rows, 16))
    if rows > 16:
        # keep padding overhead small for mid-size inputs while staying large
        block_rows_eff = min(block_rows_eff,
                             max(256, _round_up(-(-rows // 8), 16)))
    blocks = -(-rows // block_rows_eff)
    nslices = 2 if blocks >= 2 else 1          # megacore split (v7x: 2 TCs)
    inner = -(-blocks // nslices)
    rows_pad = nslices * inner * block_rows_eff
    total = rows_pad * cols

    def to_slab(x):
        if x.dtype not in (jnp.float32, jnp.bfloat16):
            x = x.astype(jnp.float32)
        flat = jnp.ravel(x)
        if total != n:                          # pad only when actually needed
            flat = jnp.pad(flat, (0, total - n))
        return flat.reshape(rows_pad, cols)

    out_s = to_slab(out)
    tgt_s = to_slab(target)

    kernel = functools.partial(_wbce_kernel, epsilon=float(epsilon),
                               w0=w0, w1=w1, n_valid=n)

    itemsize = out_s.dtype.itemsize + tgt_s.dtype.itemsize
    cost = pl.CostEstimate(flops=8 * total,
                           transcendentals=2 * total,
                           bytes_accessed=total * itemsize)

    partials = pl.pallas_call(
        kernel,
        out_shape=jax.ShapeDtypeStruct((nslices, 8, 128), jnp.float32),
        grid_spec=pltpu.PrefetchScalarGridSpec(
            num_scalar_prefetch=0,
            grid=(nslices, inner),
            in_specs=[
                pl.BlockSpec((block_rows_eff, cols),
                             lambda s, i: (s * inner + i, 0)),   # out
                pl.BlockSpec((block_rows_eff, cols),
                             lambda s, i: (s * inner + i, 0)),   # target
            ],
            out_specs=pl.BlockSpec((1, 8, 128), lambda s, i: (s, 0, 0)),
            scratch_shapes=[pltpu.VMEM((8, cols), jnp.float32)],
        ),
        compiler_params=pltpu.CompilerParams(
            dimension_semantics=("parallel", "arbitrary")),
        cost_estimate=cost,
    )(out_s, tgt_s)

    loss_sum = jnp.sum(partials[:, 0, 0])       # one identical value per slice row
    return -(loss_sum / jnp.float32(n))


def _reference_loss(out, target, weights=None, epsilon=0.01):
    o = jnp.clip(out, epsilon, 1.0 - epsilon)
    if weights is not None:
        loss = weights[0] * (target * jnp.log(o)) + weights[1] * (
            (1.0 - target) * jnp.log(1.0 - o))
    else:
        loss = 2.0 * target * jnp.log(o) + (1.0 - target) * jnp.log(1.0 - o)
    return -jnp.mean(loss)


if __name__ == "__main__":
    key = jax.random.PRNGKey(0)
    k1, k2 = jax.random.split(key)

    # Small NCHW-shaped prediction / target tensors (e.g. segmentation probs).
    out = jax.random.uniform(k1, (2, 4, 16, 16), jnp.float32, 0.0, 1.0)
    target = jax.random.bernoulli(k2, 0.5, (2, 4, 16, 16)).astype(jnp.float32)

    # No-weights path (== weights (2, 1)).
    loss_default = jax.block_until_ready(weighted_bce_loss(out, target))
    ref_default = _reference_loss(out, target)

    # Explicit weights path.
    weights = (0.7, 1.3)
    loss_w = jax.block_until_ready(weighted_bce_loss(out, target, weights=weights))
    ref_w = _reference_loss(out, target, weights=weights)

    assert jnp.allclose(loss_default, ref_default, rtol=1e-5, atol=1e-5), (
        loss_default, ref_default)
    assert jnp.allclose(loss_w, ref_w, rtol=1e-5, atol=1e-5), (loss_w, ref_w)

    print("KERNEL_OK")
</pallas_src>

<mosaic_0001>
module attributes {stable_mosaic.version = 11 : i64} {
  func.func @_wbce_kernel(%arg0: i32, %arg1: i32, %arg2: memref<16x512xf32, #tpu.memory_space<vmem>>, %arg3: memref<16x512xf32, #tpu.memory_space<vmem>>, %arg4: memref<1x8x128xf32, #tpu.memory_space<vmem>>, %arg5: memref<8x512xf32, #tpu.memory_space<vmem>>) attributes {dimension_semantics = [#tpu.dimension_semantics<parallel>, #tpu.dimension_semantics<arbitrary>], iteration_bounds = array<i64: 1, 1>, scalar_prefetch = 0 : i64, scratch_operands = 1 : i64, tpu.core_type = #tpu.core_type<tc>, window_params = [{transform_indices = @transform_0, window_bounds = array<i64: 16, 512>}, {transform_indices = @transform_1, window_bounds = array<i64: 16, 512>}, {transform_indices = @transform_2, window_bounds = array<i64: 1, 8, 128>}]} {
    %c0_i32 = arith.constant 0 : i32
    %0 = arith.cmpi eq, %arg1, %c0_i32 : i32
    %1 = arith.extui %0 : i1 to i32
    %c0_i32_0 = arith.constant 0 : i32
    %2 = arith.cmpi ne, %1, %c0_i32_0 : i32
    scf.if %2 {
      %cst_14 = arith.constant 0.000000e+00 : f32
      %35 = vector.broadcast %cst_14 : f32 to vector<8x512xf32>
      %c0_15 = arith.constant 0 : index
      %c0_16 = arith.constant 0 : index
      %36 = vector.load %arg5[%c0_15, %c0_16] : memref<8x512xf32, #tpu.memory_space<vmem>>, vector<8x512xf32>
      tpu.vector_store %arg5[%c0_15, %c0_16], %35 {strides = array<i32>} : memref<8x512xf32, #tpu.memory_space<vmem>>, vector<8x512xf32>,
    } else {
    }
    %c0 = arith.constant 0 : index
    %c0_1 = arith.constant 0 : index
    %3 = vector.load %arg2[%c0, %c0_1] : memref<16x512xf32, #tpu.memory_space<vmem>>, vector<16x512xf32>
    %cst = arith.constant 0.00999999977 : f32
    %cst_2 = arith.constant 9.900000e-01 : f32
    %4 = vector.broadcast %cst : f32 to vector<16x512xf32>
    %5 = arith.maximumf %4, %3 : vector<16x512xf32>
    %6 = vector.broadcast %cst_2 : f32 to vector<16x512xf32>
    %7 = arith.minimumf %6, %5 : vector<16x512xf32>
    %c0_3 = arith.constant 0 : index
    %c0_4 = arith.constant 0 : index
    %8 = vector.load %arg3[%c0_3, %c0_4] : memref<16x512xf32, #tpu.memory_space<vmem>>, vector<16x512xf32>
    %9 = math.log %7 : vector<16x512xf32>
    %10 = arith.mulf %8, %9 : vector<16x512xf32>
    %cst_5 = arith.constant 2.000000e+00 : f32
    %11 = vector.broadcast %cst_5 : f32 to vector<16x512xf32>
    %12 = arith.mulf %11, %10 : vector<16x512xf32>
    %cst_6 = arith.constant 1.000000e+00 : f32
    %13 = vector.broadcast %cst_6 : f32 to vector<16x512xf32>
    %14 = arith.subf %13, %8 : vector<16x512xf32>
    %cst_7 = arith.constant 1.000000e+00 : f32
    %15 = vector.broadcast %cst_7 : f32 to vector<16x512xf32>
    %16 = arith.subf %15, %7 : vector<16x512xf32>
    %17 = math.log %16 : vector<16x512xf32>
    %18 = arith.mulf %14, %17 : vector<16x512xf32>
    %cst_8 = arith.constant 1.000000e+00 : f32
    %19 = vector.broadcast %cst_8 : f32 to vector<16x512xf32>
    %20 = arith.mulf %19, %18 : vector<16x512xf32>
    %21 = arith.addf %12, %20 : vector<16x512xf32>
    %c1_i32 = arith.constant 1 : i32
    %22 = arith.muli %arg0, %c1_i32 : i32
    %23 = arith.addi %22, %arg1 : i32
    %c8192_i32 = arith.constant 8192 : i32
    %24 = arith.muli %23, %c8192_i32 : i32
    %c8192_i32_9 = arith.constant 8192 : i32
    %25 = arith.addi %24, %c8192_i32_9 : i32
    %c2048_i32 = arith.constant 2048 : i32
    %26 = arith.cmpi sle, %25, %c2048_i32 : i32
    %27 = arith.extui %26 : i1 to i32
    %c0_i32_10 = arith.constant 0 : i32
    %28 = arith.cmpi ne, %27, %c0_i32_10 : i32
    scf.if %28 {
      %c0_14 = arith.constant 0 : index
      %c0_15 = arith.constant 0 : index
      %35 = vector.load %arg5[%c0_14, %c0_15] : memref<8x512xf32, #tpu.memory_space<vmem>>, vector<8x512xf32>
      %36 = vector.shape_cast %21 : vector<16x512xf32> to vector<2x8x512xf32>
      %cst_16 = arith.constant dense<0.000000e+00> : vector<8x512xf32>
      %37 = vector.multi_reduction <add>, %36, %cst_16 [0] : vector<2x8x512xf32> to vector<8x512xf32>
      %38 = arith.addf %35, %37 : vector<8x512xf32>
      %c0_17 = arith.constant 0 : index
      %c0_18 = arith.constant 0 : index
      %39 = vector.load %arg5[%c0_17, %c0_18] : memref<8x512xf32, #tpu.memory_space<vmem>>, vector<8x512xf32>
      tpu.vector_store %arg5[%c0_17, %c0_18], %38 {strides = array<i32>} : memref<8x512xf32, #tpu.memory_space<vmem>>, vector<8x512xf32>,
    } else {
    }
    %true = arith.constant true
    %29 = arith.xori %26, %true : i1
    %30 = arith.extui %29 : i1 to i32
    %c0_i32_11 = arith.constant 0 : i32
    %31 = arith.cmpi ne, %30, %c0_i32_11 : i32
    scf.if %31 {
      %35 = tpu.iota {dimensions = array<i32: 0>} : vector<16x512xi32>
      %36 = tpu.iota {dimensions = array<i32: 1>} : vector<16x512xi32>
      %c512_i32 = arith.constant 512 : i32
      %37 = vector.broadcast %c512_i32 : i32 to vector<16x512xi32>
      %38 = arith.muli %35, %37 : vector<16x512xi32>
      %39 = vector.broadcast %24 : i32 to vector<16x512xi32>
      %40 = arith.addi %39, %38 : vector<16x512xi32>
      %41 = arith.addi %40, %36 : vector<16x512xi32>
      %c2048_i32_14 = arith.constant 2048 : i32
      %42 = vector.broadcast %c2048_i32_14 : i32 to vector<16x512xi32>
      %43 = arith.cmpi slt, %41, %42 : vector<16x512xi32>
      %cst_15 = arith.constant 0.000000e+00 : f32
      %44 = vector.broadcast %cst_15 : f32 to vector<16x512xf32>
      %45 = arith.select %43, %21, %44 : vector<16x512xi1>, vector<16x512xf32>
      %c0_16 = arith.constant 0 : index
      %c0_17 = arith.constant 0 : index
      %46 = vector.load %arg5[%c0_16, %c0_17] : memref<8x512xf32, #tpu.memory_space<vmem>>, vector<8x512xf32>
      %47 = vector.shape_cast %45 : vector<16x512xf32> to vector<2x8x512xf32>
      %cst_18 = arith.constant dense<0.000000e+00> : vector<8x512xf32>
      %48 = vector.multi_reduction <add>, %47, %cst_18 [0] : vector<2x8x512xf32> to vector<8x512xf32>
      %49 = arith.addf %46, %48 : vector<8x512xf32>
      %c0_19 = arith.constant 0 : index
      %c0_20 = arith.constant 0 : index
      %50 = vector.load %arg5[%c0_19, %c0_20] : memref<8x512xf32, #tpu.memory_space<vmem>>, vector<8x512xf32>
      tpu.vector_store %arg5[%c0_19, %c0_20], %49 {strides = array<i32>} : memref<8x512xf32, #tpu.memory_space<vmem>>, vector<8x512xf32>,
    } else {
    }
    %c0_i32_12 = arith.constant 0 : i32
    %32 = arith.cmpi eq, %arg1, %c0_i32_12 : i32
    %33 = arith.extui %32 : i1 to i32
    %c0_i32_13 = arith.constant 0 : i32
    %34 = arith.cmpi ne, %33, %c0_i32_13 : i32
    scf.if %34 {
      %c0_14 = arith.constant 0 : index
      %c0_15 = arith.constant 0 : index
      %35 = vector.load %arg5[%c0_14, %c0_15] : memref<8x512xf32, #tpu.memory_space<vmem>>, vector<8x512xf32>
      %36 = vector.shape_cast %35 : vector<8x512xf32> to vector<1x8x512xf32>
      %cst_16 = arith.constant dense<0.000000e+00> : vector<1xf32>
      %37 = vector.multi_reduction <add>, %36, %cst_16 [1, 2] : vector<1x8x512xf32> to vector<1xf32>
      %38 = vector.shape_cast %37 : vector<1xf32> to vector<1x1x1xf32>
      %39 = vector.extract %38[0, 0, 0] : f32 from vector<1x1x1xf32>
      %cst_17 = arith.constant 0.000000e+00 : f32
      %40 = vector.broadcast %cst_17 : f32 to vector<1x8x128xf32>
      %41 = vector.broadcast %39 : f32 to vector<1x8x128xf32>
      %42 = arith.addf %40, %41 : vector<1x8x128xf32>
      %c0_18 = arith.constant 0 : index
      %c0_19 = arith.constant 0 : index
      %c0_20 = arith.constant 0 : index
      %43 = vector.load %arg4[%c0_18, %c0_19, %c0_20] : memref<1x8x128xf32, #tpu.memory_space<vmem>>, vector<1x8x128xf32>
      tpu.vector_store %arg4[%c0_18, %c0_19, %c0_20], %42 {strides = array<i32>} : memref<1x8x128xf32, #tpu.memory_space<vmem>>, vector<1x8x128xf32>,
    } else {
    }
    return
  }
  func.func @transform_0(%arg0: i32, %arg1: i32) -> (i32, i32) {
    %c1_i32 = arith.constant 1 : i32
    %0 = arith.muli %arg0, %c1_i32 : i32
    %1 = arith.addi %0, %arg1 : i32
    %c0_i32 = arith.constant 0 : i32
    %c0_i32_0 = arith.constant 0 : i32
    return %1, %c0_i32 : i32, i32
  }
  func.func @transform_1(%arg0: i32, %arg1: i32) -> (i32, i32) {
    %c1_i32 = arith.constant 1 : i32
    %0 = arith.muli %arg0, %c1_i32 : i32
    %1 = arith.addi %0, %arg1 : i32
    %c0_i32 = arith.constant 0 : i32
    %c0_i32_0 = arith.constant 0 : i32
    return %1, %c0_i32 : i32, i32
  }
  func.func @transform_2(%arg0: i32, %arg1: i32) -> (i32, i32, i32) {
    %c0_i32 = arith.constant 0 : i32
    %c0_i32_0 = arith.constant 0 : i32
    %c0_i32_1 = arith.constant 0 : i32
    return %arg0, %c0_i32, %c0_i32_0 : i32, i32, i32
  }
}

</mosaic_0001>

<llo_original>
// kernel: tpu_custom_call.1
$region0: #{tpu_custom_call.1}
  #allocation0 [shape = 'u32[]', space=smem, size = 0x4, offset = 0x4, fixed_abs, tag = 'smem constant byte address 0x4 - core index']
  #allocation1 [shape = 'u32[72,128]{1,0:T(1,128)}', space=vmem, size = 0x9000, scoped, tag = 'internal scratch']
  #allocation2 [shape = 'f32[8,512]{1,0:T(8,128)}', space=vmem, size = 0x4000, scoped, tag = 'scratch operand']
  %s0 = inlined_call_operand.hbm [shape: f32[16,512], index: 0, kind: input, shape index: {}]
  %s1 = inlined_call_operand.hbm [shape: f32[16,512], index: 1, kind: input, shape index: {}]
  %s2 = inlined_call_operand.hbm [shape: f32[1,8,128], index: 2, kind: output, shape index: {}]
  %s3 = sld [smem:[#allocation0]]
  $region42: #{tpu_custom_call.1} parent=0
    _
  %s5 = ssub.s32 1, %s3
  %s6 = scalar_select 0, %s5, %s3
  $region1: #{tpu_custom_call.1} parent=0
    #allocation3 [shape = 'u8[32768]{0}', space=vmem, size = 0x8000, scoped, tag = 'input window, operand 0, single buffered']
    #allocation4 [shape = 's32[1]{0}', space=sflag, size = 0x4, scoped, tag = 'scoped memory for tpu_custom_call.1']
    #allocation5 [shape = 's32[1]{0}', space=sflag, size = 0x4, scoped, tag = 'scoped memory for tpu_custom_call.1']
    #allocation6 [shape = 'u8[32768]{0}', space=vmem, size = 0x8000, scoped, tag = 'input window, operand 1, single buffered']
    #allocation7 [shape = 's32[1]{0}', space=sflag, size = 0x4, scoped, tag = 'scoped memory for tpu_custom_call.1']
    #allocation8 [shape = 'u8[4096]{0}', space=vmem, size = 0x1000, scoped, tag = 'output window, operand 0, single buffered']
    %7 = vsyncpa [#allocation4], 0
    %8 = vsyncpa [#allocation7], 0
    %9 = vsyncpa [#allocation5], 0
    // Predicated region
    $region2: #{tpu_custom_call.1} parent=1 // pred_check
      _
    $region3: #{tpu_custom_call.1} parent=1 // pred_check_branch
      %11 = sbr.rel (0) target = $region5
    $region4: #{tpu_custom_call.1} parent=1 // pred_region
      %s12 = sadd.s32 0, 0
      %s13 = smul.u32 2, %s12
      %15 = vsyncadd [#allocation4], 0
      %s16 = smul.addr %s13, 4
      %s17 = smul.addr %s16, 8
      %s18 = scalar_lea.hbm %s0, %s17
      %s19 = sshll.u32 %s18, 4
      %s20 = int_to_ptr.hbm [resolvable:$true] %s19
      %s21 = sshll.u32 [#allocation3], 4
      %s22 = int_to_ptr.vmem [resolvable:$true] %s21
      %27 = dma.hbm_to_vmem [thread:$0]  %s20, 1024, %s22, [#allocation4], 512, 512, 32
    $region5: #{tpu_custom_call.1} parent=1 // pred_fallthru
      _
    // Predicated region
    $region6: #{tpu_custom_call.1} parent=1 // pred_check
      _
    $region7: #{tpu_custom_call.1} parent=1 // pred_check_branch
      %29 = sbr.rel (0) target = $region9
    $region8: #{tpu_custom_call.1} parent=1 // pred_region
      %s30 = sadd.s32 0, 0
      %s31 = smul.u32 2, %s30
      %33 = vsyncadd [#allocation7], 0
      %s34 = smul.addr %s31, 4
      %s35 = smul.addr %s34, 8
      %s36 = scalar_lea.hbm %s1, %s35
      %s37 = sshll.u32 %s36, 4
      %s38 = int_to_ptr.hbm [resolvable:$true] %s37
      %s39 = sshll.u32 [#allocation6], 4
      %s40 = int_to_ptr.vmem [resolvable:$true] %s39
      %45 = dma.hbm_to_vmem [thread:$0]  %s38, 1024, %s40, [#allocation7], 512, 512, 32
    $region9: #{tpu_custom_call.1} parent=1 // pred_fallthru
      _
    // Predicated region
    $region10: #{tpu_custom_call.1} parent=1 // pred_check
      _
    $region11: #{tpu_custom_call.1} parent=1 // pred_check_branch
      %47 = sbr.rel (0) target = $region13
    $region12: #{tpu_custom_call.1} parent=1 // pred_region
      %49 = dma.done [#allocation4], 1024
    $region13: #{tpu_custom_call.1} parent=1 // pred_fallthru
      _
    // Predicated region
    $region14: #{tpu_custom_call.1} parent=1 // pred_check
      _
    $region15: #{tpu_custom_call.1} parent=1 // pred_check_branch
      %51 = sbr.rel (0) target = $region17
    $region16: #{tpu_custom_call.1} parent=1 // pred_region
      %53 = dma.done [#allocation7], 1024
    $region17: #{tpu_custom_call.1} parent=1 // pred_fallthru
      _
    %s54 = sadd.s32 0, 0
    %s55 = smul.u32 2, %s54
    %s56 = sadd.s32 0, 0
    %s57 = smul.u32 2, %s56
    %p58 = scmp.eq.s32.totalorder 0, 0
    // Predicated region
    $region18: #{tpu_custom_call.1} parent=1 // pred_check
      %p59 = pneg %p58
    $region19: #{tpu_custom_call.1} parent=1 // pred_check_branch
      %61 = sbr.rel (%p59) target = $region21
    $region20: #{tpu_custom_call.1} parent=1 // pred_region
      %62 = vst [vmem:[#allocation2] sm:$0xff] 0.0
      %63 = vst [vmem:[#allocation2 + $0x8] sm:$0xff] 0.0
      %64 = vst [vmem:[#allocation2 + $0x10] sm:$0xff] 0.0
      %65 = vst [vmem:[#allocation2 + $0x18] sm:$0xff] 0.0
    $region21: #{tpu_custom_call.1} parent=1 // pred_fallthru
      _
    %v66 = vld [vmem:[#allocation3] sm:$0xff]
    %v67 = vld [vmem:[#allocation3 + $0x8] sm:$0xff]
    %v68 = vld [vmem:[#allocation3 + $0x10] sm:$0xff]
    %v69 = vld [vmem:[#allocation3 + $0x18] sm:$0xff]
    %v70 = vld [vmem:[#allocation3 + $0x20] sm:$0xff]
    %v71 = vld [vmem:[#allocation3 + $0x28] sm:$0xff]
    %v72 = vld [vmem:[#allocation3 + $0x30] sm:$0xff]
    %v73 = vld [vmem:[#allocation3 + $0x38] sm:$0xff]
    %v74 = vmax.f32 %v66, 0.01
    %v75 = vmax.f32 %v67, 0.01
    %v76 = vmax.f32 %v68, 0.01
    %v77 = vmax.f32 %v69, 0.01
    %v78 = vmax.f32 %v70, 0.01
    %v79 = vmax.f32 %v71, 0.01
    %v80 = vmax.f32 %v72, 0.01
    %v81 = vmax.f32 %v73, 0.01
    %v82 = vmin.f32 %v74, 0.99
    %v83 = vmin.f32 %v75, 0.99
    %v84 = vmin.f32 %v76, 0.99
    %v85 = vmin.f32 %v77, 0.99
    %v86 = vmin.f32 %v78, 0.99
    %v87 = vmin.f32 %v79, 0.99
    %v88 = vmin.f32 %v80, 0.99
    %v89 = vmin.f32 %v81, 0.99
    %v90 = vld [vmem:[#allocation6] sm:$0xff]
    %v91 = vld [vmem:[#allocation6 + $0x8] sm:$0xff]
    %v92 = vld [vmem:[#allocation6 + $0x10] sm:$0xff]
    %v93 = vld [vmem:[#allocation6 + $0x18] sm:$0xff]
    %v94 = vld [vmem:[#allocation6 + $0x20] sm:$0xff]
    %v95 = vld [vmem:[#allocation6 + $0x28] sm:$0xff]
    %v96 = vld [vmem:[#allocation6 + $0x30] sm:$0xff]
    %v97 = vld [vmem:[#allocation6 + $0x38] sm:$0xff]
    %v98 = vlog2.pop %v82
    %v99 = vmul.f32 %v98, 0.6931472
    %v100 = vlog2.pop %v83
    %v101 = vmul.f32 %v100, 0.6931472
    %v102 = vlog2.pop %v84
    %v103 = vmul.f32 %v102, 0.6931472
    %v104 = vlog2.pop %v85
    %v105 = vmul.f32 %v104, 0.6931472
    %v106 = vlog2.pop %v86
    %v107 = vmul.f32 %v106, 0.6931472
    %v108 = vlog2.pop %v87
    %v109 = vmul.f32 %v108, 0.6931472
    %v110 = vlog2.pop %v88
    %v111 = vmul.f32 %v110, 0.6931472
    %v112 = vlog2.pop %v89
    %v113 = vmul.f32 %v112, 0.6931472
    %v114 = vmul.f32 %v90, %v99
    %v115 = vmul.f32 %v91, %v101
    %v116 = vmul.f32 %v92, %v103
    %v117 = vmul.f32 %v93, %v105
    %v118 = vmul.f32 %v94, %v107
    %v119 = vmul.f32 %v95, %v109
    %v120 = vmul.f32 %v96, %v111
    %v121 = vmul.f32 %v97, %v113
    %v122 = vmul.f32 %v114, 2.0
    %v123 = vmul.f32 %v115, 2.0
    %v124 = vmul.f32 %v116, 2.0
    %v125 = vmul.f32 %v117, 2.0
    %v126 = vmul.f32 %v118, 2.0
    %v127 = vmul.f32 %v119, 2.0
    %v128 = vmul.f32 %v120, 2.0
    %v129 = vmul.f32 %v121, 2.0
    %v130 = vsub.f32 1.0, %v90
    %v131 = vsub.f32 1.0, %v91
    %v132 = vsub.f32 1.0, %v92
    %v133 = vsub.f32 1.0, %v93
    %v134 = vsub.f32 1.0, %v94
    %v135 = vsub.f32 1.0, %v95
    %v136 = vsub.f32 1.0, %v96
    %v137 = vsub.f32 1.0, %v97
    %v138 = vsub.f32 1.0, %v82
    %v139 = vsub.f32 1.0, %v83
    %v140 = vsub.f32 1.0, %v84
    %v141 = vsub.f32 1.0, %v85
    %v142 = vsub.f32 1.0, %v86
    %v143 = vsub.f32 1.0, %v87
    %v144 = vsub.f32 1.0, %v88
    %v145 = vsub.f32 1.0, %v89
    %v146 = vlog2.pop %v138
    %v147 = vmul.f32 %v146, 0.6931472
    %v148 = vlog2.pop %v139
    %v149 = vmul.f32 %v148, 0.6931472
    %v150 = vlog2.pop %v140
    %v151 = vmul.f32 %v150, 0.6931472
    %v152 = vlog2.pop %v141
    %v153 = vmul.f32 %v152, 0.6931472
    %v154 = vlog2.pop %v142
    %v155 = vmul.f32 %v154, 0.6931472
    %v156 = vlog2.pop %v143
    %v157 = vmul.f32 %v156, 0.6931472
    %v158 = vlog2.pop %v144
    %v159 = vmul.f32 %v158, 0.6931472
    %v160 = vlog2.pop %v145
    %v161 = vmul.f32 %v160, 0.6931472
    %v162 = vmul.f32 %v130, %v147
    %v163 = vmul.f32 %v131, %v149
    %v164 = vmul.f32 %v132, %v151
    %v165 = vmul.f32 %v133, %v153
    %v166 = vmul.f32 %v134, %v155
    %v167 = vmul.f32 %v135, %v157
    %v168 = vmul.f32 %v136, %v159
    %v169 = vmul.f32 %v137, %v161
    %v170 = vadd.f32 %v122, %v162
    %v171 = vadd.f32 %v123, %v163
    %v172 = vadd.f32 %v124, %v164
    %v173 = vadd.f32 %v125, %v165
    %v174 = vadd.f32 %v126, %v166
    %v175 = vadd.f32 %v127, %v167
    %v176 = vadd.f32 %v128, %v168
    %v177 = vadd.f32 %v129, %v169
    %s178 = sadd.s32 0, 0
    %s179 = smul.u32 %s178, 8192
    %s180 = sadd.s32 %s179, 8192
    %p181 = scmp.le.s32.totalorder %s180, 2048
    // Predicated region
    $region22: #{tpu_custom_call.1} parent=1 // pred_check
      %p182 = pneg %p181
    $region23: #{tpu_custom_call.1} parent=1 // pred_check_branch
      %184 = sbr.rel (%p182) target = $region25
    $region24: #{tpu_custom_call.1} parent=1 // pred_region
      %v185 = vld [vmem:[#allocation2] sm:$0xff]
      %v186 = vld [vmem:[#allocation2 + $0x8] sm:$0xff]
      %v187 = vld [vmem:[#allocation2 + $0x10] sm:$0xff]
      %v188 = vld [vmem:[#allocation2 + $0x18] sm:$0xff]
      %v189 = vadd.f32 %v170, %v174
      %v190 = vadd.f32 %v171, %v175
      %v191 = vadd.f32 %v172, %v176
      %v192 = vadd.f32 %v173, %v177
      %v193 = vadd.f32 %v185, %v189
      %v194 = vadd.f32 %v186, %v190
      %v195 = vadd.f32 %v187, %v191
      %v196 = vadd.f32 %v188, %v192
      %197 = vst [vmem:[#allocation2] sm:$0xff] %v193
      %198 = vst [vmem:[#allocation2 + $0x8] sm:$0xff] %v194
      %199 = vst [vmem:[#allocation2 + $0x10] sm:$0xff] %v195
      %200 = vst [vmem:[#allocation2 + $0x18] sm:$0xff] %v196
    $region25: #{tpu_custom_call.1} parent=1 // pred_fallthru
      _
    %p201 = scmp.gt.s32.totalorder %s180, 2048
    // Predicated region
    $region26: #{tpu_custom_call.1} parent=1 // pred_check
      %p202 = pneg %p201
    $region27: #{tpu_custom_call.1} parent=1 // pred_check_branch
      %204 = sbr.rel (%p202) target = $region29
    $region28: #{tpu_custom_call.1} parent=1 // pred_region
      %v205 = vlaneseq
      %v206 = vshrl.u32 %v205, 7
      %v207 = vadd.s32 %v206, 8
      %v208 = vlaneseq
      %v209 = vand.u32 %v208, 127
      %v210 = vadd.s32 %v209, 128
      %v211 = vadd.s32 %v209, 256
      %v212 = vadd.s32 %v209, 384
      %v213 = vmul.u32 %v206, 512
      %v214 = vmul.u32 %v207, 512
      %v215 = vstv %s179
      %v216 = vadd.s32 %v215, %v213
      %v217 = vadd.s32 %v215, %v214
      %v218 = vadd.s32 %v216, %v209
      %v219 = vadd.s32 %v216, %v210
      %v220 = vadd.s32 %v216, %v211
      %v221 = vadd.s32 %v216, %v212
      %v222 = vadd.s32 %v217, %v209
      %v223 = vadd.s32 %v217, %v210
      %v224 = vadd.s32 %v217, %v211
      %v225 = vadd.s32 %v217, %v212
      %vm226 = vcmp.lt.s32.totalorder %v218, 2048
      %vm227 = vcmp.lt.s32.totalorder %v219, 2048
      %vm228 = vcmp.lt.s32.totalorder %v220, 2048
      %vm229 = vcmp.lt.s32.totalorder %v221, 2048
      %vm230 = vcmp.lt.s32.totalorder %v222, 2048
      %vm231 = vcmp.lt.s32.totalorder %v223, 2048
      %vm232 = vcmp.lt.s32.totalorder %v224, 2048
      %vm233 = vcmp.lt.s32.totalorder %v225, 2048
      %v234 = vsel %vm226, %v170, 0.0
      %v235 = vsel %vm227, %v171, 0.0
      %v236 = vsel %vm228, %v172, 0.0
      %v237 = vsel %vm229, %v173, 0.0
      %v238 = vsel %vm230, %v174, 0.0
      %v239 = vsel %vm231, %v175, 0.0
      %v240 = vsel %vm232, %v176, 0.0
      %v241 = vsel %vm233, %v177, 0.0
      %v242 = vld [vmem:[#allocation2] sm:$0xff]
      %v243 = vld [vmem:[#allocation2 + $0x8] sm:$0xff]
      %v244 = vld [vmem:[#allocation2 + $0x10] sm:$0xff]
      %v245 = vld [vmem:[#allocation2 + $0x18] sm:$0xff]
      %v246 = vadd.f32 %v234, %v238
      %v247 = vadd.f32 %v235, %v239
      %v248 = vadd.f32 %v236, %v240
      %v249 = vadd.f32 %v237, %v241
      %v250 = vadd.f32 %v242, %v246
      %v251 = vadd.f32 %v243, %v247
      %v252 = vadd.f32 %v244, %v248
      %v253 = vadd.f32 %v245, %v249
      %254 = vst [vmem:[#allocation2] sm:$0xff] %v250
      %255 = vst [vmem:[#allocation2 + $0x8] sm:$0xff] %v251
      %256 = vst [vmem:[#allocation2 + $0x10] sm:$0xff] %v252
      %257 = vst [vmem:[#allocation2 + $0x18] sm:$0xff] %v253
    $region29: #{tpu_custom_call.1} parent=1 // pred_fallthru
      _
    // Predicated region
    $region30: #{tpu_custom_call.1} parent=1 // pred_check
      %p258 = pneg %p58
    $region31: #{tpu_custom_call.1} parent=1 // pred_check_branch
      %260 = sbr.rel (%p258) target = $region33
    $region32: #{tpu_custom_call.1} parent=1 // pred_region
      %v261 = vld [vmem:[#allocation2] sm:$0xff]
      %v262 = vld [vmem:[#allocation2 + $0x8] sm:$0xff]
      %v263 = vld [vmem:[#allocation2 + $0x10] sm:$0xff]
      %v264 = vld [vmem:[#allocation2 + $0x18] sm:$0xff]
      %v265 = vadd.f32 %v261, %v262
      %v266 = vadd.f32 %v265, %v263
      %v267 = vadd.f32 %v266, %v264
      %268 = vadd.xlane.f32.xlu0 %v267
      %v269 = vpop.xlane.xlu0 %268
      %v270 = vrot.slane %v269, 4
      %v271 = vadd.f32 %v269, %v270
      %v272 = vrot.slane %v271, 2
      %v273 = vadd.f32 %v271, %v272
      %v274 = vrot.slane %v273, 1
      %v275 = vadd.f32 %v273, %v274
      %s276 = vtos %v275
      %v277 = vstv %s276
      %v278 = vadd.f32 %v277, 0.0
      %279 = vst [vmem:[#allocation8] sm:$0xff] %v278
    $region33: #{tpu_custom_call.1} parent=1 // pred_fallthru
      _
    // Predicated region
    $region34: #{tpu_custom_call.1} parent=1 // pred_check
      _
    $region35: #{tpu_custom_call.1} parent=1 // pred_check_branch
      %281 = sbr.rel (0) target = $region37
    $region36: #{tpu_custom_call.1} parent=1 // pred_region
      %283 = vsyncadd [#allocation5], 0
      %s285 = sshll.u32 [#allocation8], 4
      %s286 = int_to_ptr.vmem [resolvable:$true] %s285
      %s287 = sshll.u32 %s2, 4
      %s288 = int_to_ptr.hbm [resolvable:$true] %s287
      %290 = dma.vmem_to_hbm [thread:$0]  %s286, 128, %s288, [#allocation5]
    $region37: #{tpu_custom_call.1} parent=1 // pred_fallthru
      _
    // Predicated region
    $region38: #{tpu_custom_call.1} parent=1 // pred_check
      _
    $region39: #{tpu_custom_call.1} parent=1 // pred_check_branch
      %292 = sbr.rel (0) target = $region41
    $region40: #{tpu_custom_call.1} parent=1 // pred_region
      %294 = dma.done [#allocation5], 128
    $region41: #{tpu_custom_call.1} parent=1 // pred_fallthru
      _
    %295 = vsyncpa [#allocation4], 1
    %296 = vsyncpa [#allocation7], 1
    %297 = vsyncpa [#allocation5], 1

</llo_original>
